<compile_context>
chip_gen: v7x
topology: tpu7x:2x2x1
jax: 0.10.0
libtpu: 0.0.40
codegen_flags: <defaults>
</compile_context>

<pallas_src>
import functools

import jax
import jax.numpy as jnp
from jax.experimental import pallas as pl
from jax.experimental.pallas import tpu as pltpu


def _round_up(v, m):
    return ((v + m - 1) // m) * m


# ---------------------------------------------------------------------------
# Kernels
# ---------------------------------------------------------------------------
def _addmm_small_kernel(i_ref, x_ref, y_ref, o_ref, *, beta, alpha):
    """Whole-problem kernel: everything already resident in VMEM."""
    acc = jnp.dot(x_ref[...], y_ref[...], preferred_element_type=jnp.float32)
    # i_ref may be (1, N), (M, 1), (1, 1) or (M, N); broadcast is free in-vreg.
    o_ref[...] = (beta * i_ref[...].astype(jnp.float32) + alpha * acc).astype(
        o_ref.dtype
    )


def _addmm_tiled_kernel(i_ref, x_ref, y_ref, o_ref, acc_ref, *, beta, alpha):
    """Tiled kernel: grid = (M/tm, N/tn, K/tk); K (reduction) is the last axis."""

    @pl.when(pl.program_id(2) == 0)
    def _():
        acc_ref[...] = jnp.zeros_like(acc_ref)

    acc_ref[...] += jnp.dot(
        x_ref[...], y_ref[...], preferred_element_type=jnp.float32
    )

    @pl.when(pl.program_id(2) == pl.num_programs(2) - 1)
    def _():
        # Bias block may be (1, tn) / (tm, 1) / (1, 1); broadcast in-vreg.
        o_ref[...] = (
            beta * i_ref[...].astype(jnp.float32) + alpha * acc_ref[...]
        ).astype(o_ref.dtype)


# ---------------------------------------------------------------------------
# Wrapper
# ---------------------------------------------------------------------------
def addmm(i, x, y, *, beta=1.0, alpha=2.0, _force_tiled=False):
    """Pallas implementation of torch.addmm(i, x, y, beta=beta, alpha=alpha)."""
    M, K = x.shape
    K2, N = y.shape
    assert K == K2, "inner dimensions must match"

    out_dtype = jnp.result_type(i.dtype, x.dtype, y.dtype)

    # Normalize the bias to 2-D WITHOUT materializing an (M, N) broadcast in HBM.
    i2 = jnp.asarray(i)
    if i2.ndim == 0:
        i2 = i2.reshape(1, 1)
    elif i2.ndim == 1:
        i2 = i2.reshape(1, i2.shape[0])
    if i2.ndim != 2 or i2.shape[0] not in (1, M) or i2.shape[1] not in (1, N):
        raise ValueError(f"bias shape {i.shape} not broadcastable to ({M}, {N})")

    # torch.addmm with beta == 0 ignores `i` completely (no NaN/Inf propagation).
    if beta == 0.0:
        i2 = jnp.zeros((1, 1), dtype=out_dtype)

    # ---------------- small-shape fast path ----------------
    in_bytes = (
        i2.size * i2.dtype.itemsize
        + x.size * x.dtype.itemsize
        + y.size * y.dtype.itemsize
    )
    out_bytes = M * N * jnp.dtype(out_dtype).itemsize
    footprint = in_bytes + out_bytes + M * N * 4  # + f32 accumulator headroom
    if footprint <= 8 * 1024 * 1024 and not _force_tiled:
        kernel = functools.partial(_addmm_small_kernel, beta=beta, alpha=alpha)
        # No grid: one invocation, whole operands DMA'd into VMEM once.
        return pl.pallas_call(
            kernel,
            out_shape=jax.ShapeDtypeStruct((M, N), out_dtype),
        )(i2, x, y)

    # ---------------- tiled path ----------------
    # MXU/DMA-friendly tiles. Per-tile double-buffered footprint stays well
    # under the default scoped-VMEM limit on v5e/v6e/v7x. bf16 operands are
    # half the bytes, so the K tile can be twice as deep (fewer grid steps).
    in_itemsize = max(jnp.dtype(x.dtype).itemsize, jnp.dtype(y.dtype).itemsize)
    tk_max = 512 if in_itemsize >= 4 else 1024

    tm = 256 if M >= 256 else _round_up(M, 8)
    tn = 512 if N >= 512 else _round_up(N, 128)        # lane-dense output
    tk = tk_max if K >= tk_max else _round_up(K, 128)

    Mp, Np, Kp = _round_up(M, tm), _round_up(N, tn), _round_up(K, tk)

    # Zero-pad non-divisible shapes (zeros contribute nothing to the dot;
    # padded output rows/cols are sliced away at the end).
    xp = x if (Mp == M and Kp == K) else jnp.pad(x, ((0, Mp - M), (0, Kp - K)))
    yp = y if (Kp == K and Np == N) else jnp.pad(y, ((0, Kp - K), (0, Np - N)))

    ir, ic = i2.shape
    pad_r = (Mp - ir) if ir == M else 0
    pad_c = (Np - ic) if ic == N else 0
    ip = i2 if (pad_r == 0 and pad_c == 0) else jnp.pad(i2, ((0, pad_r), (0, pad_c)))

    i_rows, i_cols = ip.shape
    bias_bm = tm if i_rows > 1 else 1
    bias_bn = tn if i_cols > 1 else 1

    def bias_index_map(m, n, k, _r=(i_rows > 1), _c=(i_cols > 1)):
        return (m if _r else 0, n if _c else 0)

    kernel = functools.partial(_addmm_tiled_kernel, beta=beta, alpha=alpha)

    out_p = pl.pallas_call(
        kernel,
        out_shape=jax.ShapeDtypeStruct((Mp, Np), out_dtype),
        grid_spec=pltpu.PrefetchScalarGridSpec(
            num_scalar_prefetch=0,
            grid=(Mp // tm, Np // tn, Kp // tk),
            in_specs=[
                pl.BlockSpec((bias_bm, bias_bn), bias_index_map),     # bias
                pl.BlockSpec((tm, tk), lambda m, n, k: (m, k)),       # x
                pl.BlockSpec((tk, tn), lambda m, n, k: (k, n)),       # y
            ],
            out_specs=pl.BlockSpec((tm, tn), lambda m, n, k: (m, n)),
            scratch_shapes=[pltpu.VMEM((tm, tn), jnp.float32)],
        ),
        compiler_params=pltpu.CompilerParams(
            dimension_semantics=("parallel", "parallel", "arbitrary")
        ),
    )(ip, xp, yp)

    if Mp != M or Np != N:
        out_p = out_p[:M, :N]
    return out_p


# ---------------------------------------------------------------------------
# Self-test
# ---------------------------------------------------------------------------
if __name__ == "__main__":
    beta, alpha = 1.0, 2.0  # defaults from TestAddMMModel.__init__

    # --- shapes consistent with torch.addmm: i (M,N), x (M,K), y (K,N) ---
    M, K, N = 16, 32, 128
    key = jax.random.PRNGKey(0)
    ki, kx, ky = jax.random.split(key, 3)
    i = jax.random.normal(ki, (M, N), dtype=jnp.float32)
    x = jax.random.normal(kx, (M, K), dtype=jnp.float32)
    y = jax.random.normal(ky, (K, N), dtype=jnp.float32)

    # 1) Small-shape fast path (single-block kernel).
    z = jax.block_until_ready(addmm(i, x, y, beta=beta, alpha=alpha))
    ref = beta * i + alpha * jnp.dot(x, y, precision=jax.lax.Precision.HIGHEST)
    assert z.shape == (M, N)
    assert jnp.allclose(z, ref, atol=1e-3, rtol=1e-3), "fast path mismatch"

    # 2) Tiled path with a 1-D bias (broadcast handled in the BlockSpec) and
    #    non-tile-multiple dims (exercises the padding + accumulator logic).
    M2, K2, N2 = 200, 300, 384
    kb, kx2, ky2 = jax.random.split(jax.random.PRNGKey(1), 3)
    b1 = jax.random.normal(kb, (N2,), dtype=jnp.float32)
    x2 = jax.random.normal(kx2, (M2, K2), dtype=jnp.float32)
    y2 = jax.random.normal(ky2, (K2, N2), dtype=jnp.float32)
    z2 = jax.block_until_ready(
        addmm(b1, x2, y2, beta=beta, alpha=alpha, _force_tiled=True)
    )
    ref2 = beta * b1 + alpha * jnp.dot(x2, y2, precision=jax.lax.Precision.HIGHEST)
    assert z2.shape == (M2, N2)
    assert jnp.allclose(z2, ref2, atol=5e-2, rtol=5e-3), "tiled path mismatch"

    print("KERNEL_OK")
</pallas_src>

<mosaic_0001>
module attributes {stable_mosaic.version = 11 : i64} {
  func.func @_addmm_small_kernel(%arg0: memref<16x128xf32, #tpu.memory_space<vmem>>, %arg1: memref<16x32xf32, #tpu.memory_space<vmem>>, %arg2: memref<32x128xf32, #tpu.memory_space<vmem>>, %arg3: memref<16x128xf32, #tpu.memory_space<vmem>>) attributes {dimension_semantics = [], scalar_prefetch = 0 : i64, scratch_operands = 0 : i64, tpu.core_type = #tpu.core_type<tc>} {
    %c0 = arith.constant 0 : index
    %c0_0 = arith.constant 0 : index
    %0 = vector.load %arg1[%c0, %c0_0] : memref<16x32xf32, #tpu.memory_space<vmem>>, vector<16x32xf32>
    %c0_1 = arith.constant 0 : index
    %c0_2 = arith.constant 0 : index
    %1 = vector.load %arg2[%c0_1, %c0_2] : memref<32x128xf32, #tpu.memory_space<vmem>>, vector<32x128xf32>
    %cst = arith.constant dense<0.000000e+00> : vector<16x128xf32>
    %2 = tpu.matmul %0, %1, %cst {dimension_numbers = #tpu.dot_dimension_numbers<[1], [0], [0], [1], [0, 0, 1, 1], [], []>} : vector<16x32xf32>, vector<32x128xf32>, vector<16x128xf32> -> vector<16x128xf32>
    %c0_3 = arith.constant 0 : index
    %c0_4 = arith.constant 0 : index
    %3 = vector.load %arg0[%c0_3, %c0_4] : memref<16x128xf32, #tpu.memory_space<vmem>>, vector<16x128xf32>
    %cst_5 = arith.constant 1.000000e+00 : f32
    %4 = vector.broadcast %cst_5 : f32 to vector<16x128xf32>
    %5 = arith.mulf %4, %3 : vector<16x128xf32>
    %cst_6 = arith.constant 2.000000e+00 : f32
    %6 = vector.broadcast %cst_6 : f32 to vector<16x128xf32>
    %7 = arith.mulf %6, %2 : vector<16x128xf32>
    %8 = arith.addf %5, %7 : vector<16x128xf32>
    %c0_7 = arith.constant 0 : index
    %c0_8 = arith.constant 0 : index
    %9 = vector.load %arg3[%c0_7, %c0_8] : memref<16x128xf32, #tpu.memory_space<vmem>>, vector<16x128xf32>
    tpu.vector_store %arg3[%c0_7, %c0_8], %8 {strides = array<i32>} : memref<16x128xf32, #tpu.memory_space<vmem>>, vector<16x128xf32>,
    return
  }
}

</mosaic_0001>

<llo_original>
// kernel: tpu_custom_call.1
$region0: #{tpu_custom_call.1}
  #allocation0 [shape = 'u32[]', space=smem, size = 0x4, offset = 0x4, fixed_abs, tag = 'smem constant byte address 0x4 - core index']
  #allocation1 [shape = 'u32[144,128]{1,0:T(1,128)}', space=vmem, size = 0x12000, scoped, tag = 'internal scratch']
  %s0 = inlined_call_operand.hbm [shape: f32[16,128], index: 0, kind: input, shape index: {}]
  %s1 = inlined_call_operand.hbm [shape: f32[16,32], index: 1, kind: input, shape index: {}]
  %s2 = inlined_call_operand.hbm [shape: f32[32,128], index: 2, kind: input, shape index: {}]
  %s3 = inlined_call_operand.hbm [shape: f32[16,128], index: 3, kind: output, shape index: {}]
  %s4 = sld [smem:[#allocation0]]
  $region34: #{tpu_custom_call.1} parent=0
    _
  %s6 = ssub.s32 1, %s4
  %s7 = scalar_select 0, %s6, %s4
  $region1: #{tpu_custom_call.1} parent=0
    #allocation2 [shape = 'u8[8192]{0}', space=vmem, size = 0x2000, scoped, tag = 'input window, operand 0, single buffered']
    #allocation3 [shape = 's32[1]{0}', space=sflag, size = 0x4, scoped, tag = 'scoped memory for tpu_custom_call.1']
    #allocation4 [shape = 's32[1]{0}', space=sflag, size = 0x4, scoped, tag = 'scoped memory for tpu_custom_call.1']
    #allocation5 [shape = 'u8[8192]{0}', space=vmem, size = 0x2000, scoped, tag = 'input window, operand 1, single buffered']
    #allocation6 [shape = 's32[1]{0}', space=sflag, size = 0x4, scoped, tag = 'scoped memory for tpu_custom_call.1']
    #allocation7 [shape = 'u8[16384]{0}', space=vmem, size = 0x4000, scoped, tag = 'input window, operand 2, single buffered']
    #allocation8 [shape = 'u8[8192]{0}', space=vmem, size = 0x2000, scoped, tag = 'output window, operand 0, single buffered']
    %8 = vsyncpa [#allocation3], 0
    %9 = vsyncpa [#allocation6], 0
    %10 = vsyncpa [#allocation4], 0
    // Predicated region
    $region2: #{tpu_custom_call.1} parent=1 // pred_check
      _
    $region3: #{tpu_custom_call.1} parent=1 // pred_check_branch
      %12 = sbr.rel (0) target = $region5
    $region4: #{tpu_custom_call.1} parent=1 // pred_region
      %s14 = ssub.s32 256, 256
      %15 = vsyncadd [#allocation3], %s14
      %s16 = sshll.u32 [#allocation2], 4
      %s17 = int_to_ptr.vmem [resolvable:$true] %s16
      %22 = dma.hbm_to_vmem [thread:$0]  %s0, 256, %s17, [#allocation3], 128, 128, 8
    $region5: #{tpu_custom_call.1} parent=1 // pred_fallthru
      _
    // Predicated region
    $region6: #{tpu_custom_call.1} parent=1 // pred_check
      _
    $region7: #{tpu_custom_call.1} parent=1 // pred_check_branch
      %24 = sbr.rel (0) target = $region9
    $region8: #{tpu_custom_call.1} parent=1 // pred_region
      %s26 = ssub.s32 256, 256
      %27 = vsyncadd [#allocation6], %s26
      %s28 = sshll.u32 [#allocation5], 4
      %s29 = int_to_ptr.vmem [resolvable:$true] %s28
      %34 = dma.hbm_to_vmem [thread:$0]  %s1, 256, %s29, [#allocation6], 128, 128, 8
    $region9: #{tpu_custom_call.1} parent=1 // pred_fallthru
      _
    // Predicated region
    $region10: #{tpu_custom_call.1} parent=1 // pred_check
      _
    $region11: #{tpu_custom_call.1} parent=1 // pred_check_branch
      %36 = sbr.rel (0) target = $region13
    $region12: #{tpu_custom_call.1} parent=1 // pred_region
      %s38 = ssub.s32 512, 512
      %39 = vsyncadd [#allocation6], %s38
      %s40 = sshll.u32 [#allocation7], 4
      %s41 = int_to_ptr.vmem [resolvable:$true] %s40
      %46 = dma.hbm_to_vmem [thread:$0]  %s2, 512, %s41, [#allocation6], 128, 128, 8
    $region13: #{tpu_custom_call.1} parent=1 // pred_fallthru
      _
    // Predicated region
    $region14: #{tpu_custom_call.1} parent=1 // pred_check
      _
    $region15: #{tpu_custom_call.1} parent=1 // pred_check_branch
      %48 = sbr.rel (0) target = $region17
    $region16: #{tpu_custom_call.1} parent=1 // pred_region
      %49 = dma.done [#allocation3], 256
    $region17: #{tpu_custom_call.1} parent=1 // pred_fallthru
      _
    // Predicated region
    $region18: #{tpu_custom_call.1} parent=1 // pred_check
      _
    $region19: #{tpu_custom_call.1} parent=1 // pred_check_branch
      %51 = sbr.rel (0) target = $region21
    $region20: #{tpu_custom_call.1} parent=1 // pred_region
      %52 = dma.done [#allocation6], 256
    $region21: #{tpu_custom_call.1} parent=1 // pred_fallthru
      _
    // Predicated region
    $region22: #{tpu_custom_call.1} parent=1 // pred_check
      _
    $region23: #{tpu_custom_call.1} parent=1 // pred_check_branch
      %54 = sbr.rel (0) target = $region25
    $region24: #{tpu_custom_call.1} parent=1 // pred_region
      %55 = dma.done [#allocation6], 512
    $region25: #{tpu_custom_call.1} parent=1 // pred_fallthru
      _
    %v56 = vld [vmem:[#allocation5] sm:$0xff]
    %v57 = vld [vmem:[#allocation5 + $0x8] sm:$0xff]
    %v58 = vld [vmem:[#allocation7] sm:$0xff]
    %v59 = vld [vmem:[#allocation7 + $0x8] sm:$0xff]
    %v60 = vld [vmem:[#allocation7 + $0x10] sm:$0xff]
    %v61 = vld [vmem:[#allocation7 + $0x18] sm:$0xff]
    %vm62 = vcmask 261120
    %v64 = vsel %vm62, %v56, 0
    %v67 = vsel %vm62, %v57, 0
    %69 = vmatprep.subr.mxu0 0.0
    %70 = vmatpush1.msra.mxu0 %v58
    %71 = vmatprep.subr.mxu0 0.0
    %72 = vmatpush1.msra.mxu0 %v59
    %73 = vmatprep.subr.mxu0 0.0
    %74 = vmatpush1.msra.mxu0 %v60
    %75 = vmatprep.subr.mxu0 0.0
    %76 = vmatpush1.msra.mxu0 %v61
    %77 = vmatprep.subr.mxu0 0.0
    %78 = vmatpush1.msra.mxu0 0.0
    %79 = vmatprep.subr.mxu0 0.0
    %80 = vmatpush1.msra.mxu0 0.0
    %81 = vmatprep.subr.mxu0 0.0
    %82 = vmatpush1.msra.mxu0 0.0
    %83 = vmatprep.subr.mxu0 0.0
    %84 = vmatpush1.msra.mxu0 0.0
    %85 = vmatprep.subr.mxu0 0.0
    %86 = vmatpush1.msra.mxu0 0.0
    %87 = vmatprep.subr.mxu0 0.0
    %88 = vmatpush1.msra.mxu0 0.0
    %89 = vmatprep.subr.mxu0 0.0
    %90 = vmatpush1.msra.mxu0 0.0
    %91 = vmatprep.subr.mxu0 0.0
    %92 = vmatpush1.msra.mxu0 0.0
    %93 = vmatprep.subr.mxu0 0.0
    %94 = vmatpush1.msra.mxu0 0.0
    %95 = vmatprep.subr.mxu0 0.0
    %96 = vmatpush1.msra.mxu0 0.0
    %97 = vmatprep.subr.mxu0 0.0
    %98 = vmatpush1.msra.mxu0 0.0
    %99 = vmatprep.subr.mxu0 0.0
    %100 = vmatpush1.msra.mxu0 0.0
    %101 = vmatprep.subr.mxu0 0.0
    %102 = vmatpush1.msra.mxu0 0.0
    %103 = vmatprep.subr.mxu0 0.0
    %104 = vmatpush1.msra.mxu0 0.0
    %105 = vmatprep.subr.mxu0 0.0
    %106 = vmatpush1.msra.mxu0 0.0
    %107 = vmatprep.subr.mxu0 0.0
    %108 = vmatpush1.msra.mxu0 0.0
    %109 = vmatprep.subr.mxu0 0.0
    %110 = vmatpush1.msra.mxu0 0.0
    %111 = vmatprep.subr.mxu0 0.0
    %112 = vmatpush1.msra.mxu0 0.0
    %113 = vmatprep.subr.mxu0 0.0
    %114 = vmatpush1.msra.mxu0 0.0
    %115 = vmatprep.subr.mxu0 0.0
    %116 = vmatpush1.msra.mxu0 0.0
    %117 = vmatprep.subr.mxu0 0.0
    %118 = vmatpush1.msra.mxu0 0.0
    %119 = vmatprep.subr.mxu0 0.0
    %120 = vmatpush1.msra.mxu0 0.0
    %121 = vmatprep.subr.mxu0 0.0
    %122 = vmatpush1.msra.mxu0 0.0
    %123 = vmatprep.subr.mxu0 0.0
    %124 = vmatpush1.msra.mxu0 0.0
    %125 = vmatprep.subr.mxu0 0.0
    %126 = vmatpush1.msra.mxu0 0.0
    %127 = vmatprep.subr.mxu0 0.0
    %128 = vmatpush1.msra.mxu0 0.0
    %129 = vmatprep.subr.mxu0 0.0
    %130 = vmatpush1.msra.mxu0 0.0
    %131 = vmatprep.subr.mxu0 0.0
    %132 = vmatpush1.msra.mxu0 0.0
    %133 = vmatprep.mubr.f32.mxu0 0.0
    %134 = vmatmul.mubr.f32.gmra.mrb[0].mxu0 %v64
    %v135 = vpop.f32.mrb[0].mxu0
    %v136 = vadd.f32 0.0, %v135
    %v137 = vpop.f32.mrb[0].mxu0
    %138 = vmatprep.mubr.f32.mxu0 0.0
    %139 = vmatmul.mubr.f32.gmra.mrb[0].mxu0 %v67
    %v140 = vpop.f32.mrb[0].mxu0
    %v141 = vadd.f32 0.0, %v140
    %v142 = vpop.f32.mrb[0].mxu0
    %143 = vdwg.mxu0
    %v144 = vld [vmem:[#allocation2] sm:$0xff]
    %v145 = vld [vmem:[#allocation2 + $0x8] sm:$0xff]
    %v146 = vmul.f32 %v136, 2.0
    %v147 = vmul.f32 %v141, 2.0
    %v148 = vadd.f32 %v144, %v146
    %v149 = vadd.f32 %v145, %v147
    %150 = vst [vmem:[#allocation8] sm:$0xff] %v148
    %151 = vst [vmem:[#allocation8 + $0x8] sm:$0xff] %v149
    // Predicated region
    $region26: #{tpu_custom_call.1} parent=1 // pred_check
      _
    $region27: #{tpu_custom_call.1} parent=1 // pred_check_branch
      %153 = sbr.rel (0) target = $region29
    $region28: #{tpu_custom_call.1} parent=1 // pred_region
      %s155 = ssub.s32 256, 256
      %156 = vsyncadd [#allocation4], %s155
      %s157 = sshll.u32 [#allocation8], 4
      %s158 = int_to_ptr.vmem [resolvable:$true] %s157
      %163 = dma.vmem_to_hbm [thread:$0]  %s158, 256, %s3, [#allocation4], 128, 128, 8
    $region29: #{tpu_custom_call.1} parent=1 // pred_fallthru
      _
    // Predicated region
    $region30: #{tpu_custom_call.1} parent=1 // pred_check
      _
    $region31: #{tpu_custom_call.1} parent=1 // pred_check_branch
      %165 = sbr.rel (0) target = $region33
    $region32: #{tpu_custom_call.1} parent=1 // pred_region
      %166 = dma.done [#allocation4], 256
    $region33: #{tpu_custom_call.1} parent=1 // pred_fallthru
      _
    %167 = vsyncpa [#allocation3], 1
    %168 = vsyncpa [#allocation6], 1
    %169 = vsyncpa [#allocation4], 1

</llo_original>
